<compile_context>
chip_gen: v6e
topology: v6e:2x2x1
jax: 0.10.0
libtpu: 0.0.40
codegen_flags: <defaults>
</compile_context>

<pallas_src>
import jax
import jax.numpy as jnp
from jax.experimental import pallas as pl
from jax.experimental.pallas import tpu as pltpu


def _merge_dma_kernel(x1_hbm, x2_hbm, o_hbm, sem):
    """Concat via two direct HBM->HBM DMAs into disjoint column windows."""
    n, f1 = x1_hbm.shape
    f2 = x2_hbm.shape[1]
    # Both DMAs are issued back-to-back so they stream concurrently; the
    # destination windows are disjoint so ordering between them is irrelevant.
    cp1 = pltpu.make_async_copy(x1_hbm, o_hbm.at[:, pl.ds(0, f1)], sem.at[0])
    cp2 = pltpu.make_async_copy(x2_hbm, o_hbm.at[:, pl.ds(f1, f2)], sem.at[1])
    cp1.start()
    cp2.start()
    cp1.wait()
    cp2.wait()


def merge(x1, x2):
    """Concatenate flattened x1 and x2 along the feature dim via Pallas DMAs.

    x1, x2: arrays with matching leading batch dim N (any trailing dims).
    Returns: (N, F1 + F2) where Fi = prod(xi.shape[1:]).
    """
    n = x1.shape[0]
    assert x2.shape[0] == n, "batch dims must match"
    x1f = jnp.reshape(x1, (n, -1))  # glue: same semantics as torch.view(N, -1)
    x2f = jnp.reshape(x2, (n, -1))
    f1, f2 = x1f.shape[1], x2f.shape[1]

    out_dtype = jnp.result_type(x1f.dtype, x2f.dtype)
    # Only cast an operand if its dtype actually differs from the result
    # dtype (no-op — and no extra HBM pass — for the common matched case,
    # e.g. the f32/f32 inputs this module sees in practice).
    if x1f.dtype != out_dtype:
        x1f = x1f.astype(out_dtype)
    if x2f.dtype != out_dtype:
        x2f = x2f.astype(out_dtype)

    return pl.pallas_call(
        _merge_dma_kernel,
        out_shape=jax.ShapeDtypeStruct((n, f1 + f2), out_dtype),
        in_specs=[
            pl.BlockSpec(memory_space=pl.ANY),  # x1 stays in HBM
            pl.BlockSpec(memory_space=pl.ANY),  # x2 stays in HBM
        ],
        out_specs=pl.BlockSpec(memory_space=pl.ANY),  # write HBM directly
        scratch_shapes=[pltpu.SemaphoreType.DMA((2,))],
    )(x1f, x2f)


if __name__ == "__main__":
    key = jax.random.PRNGKey(0)
    k1, k2 = jax.random.split(key)

    # Small NCHW inputs consistent with the module's forward
    # (two conv feature maps of different channel/spatial sizes).
    x1 = jax.random.normal(k1, (2, 4, 16, 16), dtype=jnp.float32)   # -> (2, 1024)
    x2 = jax.random.normal(k2, (2, 8, 8, 8), dtype=jnp.float32)     # -> (2, 512)

    out = merge(x1, x2)
    jax.block_until_ready(out)

    # Reference check against plain JAX (mirrors torch.cat(view, view, 1)).
    ref = jnp.concatenate(
        [x1.reshape(x1.shape[0], -1), x2.reshape(x2.shape[0], -1)], axis=1
    )
    assert out.shape == (2, 1024 + 512), out.shape
    assert jnp.allclose(out, ref), "mismatch vs reference concat"

    print("KERNEL_OK")
</pallas_src>

<mosaic_0001>
module attributes {stable_mosaic.version = 11 : i64} {
  func.func @_merge_dma_kernel(%arg0: memref<2x1024xf32, #tpu.memory_space<any>>, %arg1: memref<2x512xf32, #tpu.memory_space<any>>, %arg2: memref<2x1536xf32, #tpu.memory_space<any>>, %arg3: memref<2x!tpu.dma_semaphore, #tpu.memory_space<semaphore_mem>>) attributes {dimension_semantics = [], scalar_prefetch = 0 : i64, scratch_operands = 1 : i64, tpu.core_type = #tpu.core_type<tc>} {
    %c0_i32 = arith.constant 0 : i32
    %c0_i32_0 = arith.constant 0 : i32
    %c0_i32_1 = arith.constant 0 : i32
    %0 = tpu.memref_slice %arg2[%c0_i32_0, %c0_i32_1] : memref<2x1536xf32, #tpu.memory_space<any>> -> memref<2x1024xf32, #tpu.memory_space<any>>
    %1 = tpu.memref_slice %arg3[%c0_i32] : memref<2x!tpu.dma_semaphore, #tpu.memory_space<semaphore_mem>> -> memref<1x!tpu.dma_semaphore, #tpu.memory_space<semaphore_mem>>
    %2 = tpu.memref_squeeze %1 : memref<1x!tpu.dma_semaphore, #tpu.memory_space<semaphore_mem>> -> memref<!tpu.dma_semaphore, #tpu.memory_space<semaphore_mem>>
    tpu.enqueue_dma source(%arg0 : memref<2x1024xf32, #tpu.memory_space<any>>) target(%0 : memref<2x1024xf32, #tpu.memory_space<any>>) target_semaphore(%2 : memref<!tpu.dma_semaphore, #tpu.memory_space<semaphore_mem>>)
    %c1_i32 = arith.constant 1 : i32
    %c0_i32_2 = arith.constant 0 : i32
    %c1024_i32 = arith.constant 1024 : i32
    %3 = tpu.memref_slice %arg2[%c0_i32_2, %c1024_i32] : memref<2x1536xf32, #tpu.memory_space<any>> -> memref<2x512xf32, #tpu.memory_space<any>>
    %4 = tpu.memref_slice %arg3[%c1_i32] : memref<2x!tpu.dma_semaphore, #tpu.memory_space<semaphore_mem>> -> memref<1x!tpu.dma_semaphore, #tpu.memory_space<semaphore_mem>>
    %5 = tpu.memref_squeeze %4 : memref<1x!tpu.dma_semaphore, #tpu.memory_space<semaphore_mem>> -> memref<!tpu.dma_semaphore, #tpu.memory_space<semaphore_mem>>
    tpu.enqueue_dma source(%arg1 : memref<2x512xf32, #tpu.memory_space<any>>) target(%3 : memref<2x512xf32, #tpu.memory_space<any>>) target_semaphore(%5 : memref<!tpu.dma_semaphore, #tpu.memory_space<semaphore_mem>>)
    %c0_i32_3 = arith.constant 0 : i32
    %c0_i32_4 = arith.constant 0 : i32
    %c0_i32_5 = arith.constant 0 : i32
    %6 = tpu.memref_slice %arg2[%c0_i32_4, %c0_i32_5] : memref<2x1536xf32, #tpu.memory_space<any>> -> memref<2x1024xf32, #tpu.memory_space<any>>
    %7 = tpu.memref_slice %arg3[%c0_i32_3] : memref<2x!tpu.dma_semaphore, #tpu.memory_space<semaphore_mem>> -> memref<1x!tpu.dma_semaphore, #tpu.memory_space<semaphore_mem>>
    %8 = tpu.memref_squeeze %7 : memref<1x!tpu.dma_semaphore, #tpu.memory_space<semaphore_mem>> -> memref<!tpu.dma_semaphore, #tpu.memory_space<semaphore_mem>>
    tpu.wait_dma2 semaphore(%8 : memref<!tpu.dma_semaphore, #tpu.memory_space<semaphore_mem>>) src(%arg0 : memref<2x1024xf32, #tpu.memory_space<any>>) dst(%6 : memref<2x1024xf32, #tpu.memory_space<any>>)
    %c1_i32_6 = arith.constant 1 : i32
    %c0_i32_7 = arith.constant 0 : i32
    %c1024_i32_8 = arith.constant 1024 : i32
    %9 = tpu.memref_slice %arg2[%c0_i32_7, %c1024_i32_8] : memref<2x1536xf32, #tpu.memory_space<any>> -> memref<2x512xf32, #tpu.memory_space<any>>
    %10 = tpu.memref_slice %arg3[%c1_i32_6] : memref<2x!tpu.dma_semaphore, #tpu.memory_space<semaphore_mem>> -> memref<1x!tpu.dma_semaphore, #tpu.memory_space<semaphore_mem>>
    %11 = tpu.memref_squeeze %10 : memref<1x!tpu.dma_semaphore, #tpu.memory_space<semaphore_mem>> -> memref<!tpu.dma_semaphore, #tpu.memory_space<semaphore_mem>>
    tpu.wait_dma2 semaphore(%11 : memref<!tpu.dma_semaphore, #tpu.memory_space<semaphore_mem>>) src(%arg1 : memref<2x512xf32, #tpu.memory_space<any>>) dst(%9 : memref<2x512xf32, #tpu.memory_space<any>>)
    return
  }
}

</mosaic_0001>

<llo_original>
// kernel: tpu_custom_call.1
$region0: #{tpu_custom_call.1}
  #allocation0 [shape = 'u32[]', space=smem, size = 0x4, offset = 0x4, fixed_abs, tag = 'smem constant byte address 0x4 - core index']
  #allocation1 [shape = 'u32[144,128]{1,0:T(1,128)}', space=vmem, size = 0x12000, scoped, tag = 'internal scratch']
  #allocation2 [shape = 's32[2]{0}', space=sflag, size = 0x8, scoped, tag = 'scratch operand']
  #allocation3 [shape = 's32[]', space=sflag, size = 0x4, offset = 0, fixed_abs, tag = 'sflag constant byte address 0x0 - dummy sync flag']
  #allocation4 [shape = 'u32[0]{0}', space=smem, size = 0, offset = 0, fixed_abs, tag = 'smem constant byte address 0x0 - null']
  #allocation5 [shape = 's32[]', space=sflag, size = 0x4, offset = 0, fixed_abs, tag = 'sflag constant byte address 0x0 - dummy sync flag']
  #allocation6 [shape = 'u32[0]{0}', space=smem, size = 0, offset = 0, fixed_abs, tag = 'smem constant byte address 0x0 - null']
  %s0 = inlined_call_operand.hbm [shape: f32[2,1024], index: 0, kind: input, shape index: {}]
  %s1 = inlined_call_operand.hbm [shape: f32[2,512], index: 1, kind: input, shape index: {}]
  %s2 = inlined_call_operand.hbm [shape: f32[2,1536], index: 2, kind: output, shape index: {}]
  %s3 = sld [smem:[#allocation0]]
  $region2: #{tpu_custom_call.1} parent=0
    _
  %s5 = ssub.s32 1, %s3
  %s6 = scalar_select 0, %s5, %s3
  %s8 = sshll.u32 1, 14
  %s9 = sxor.u32 4294967295, %s8
  %13 = dma.general %s0, 256, %s2, [#allocation2], 131072, [#allocation4], 0, 0
  %s14 = scalar_lea.hbm %s2, 256
  %s15 = scalar_lea.sflag [#allocation2], 1
  %s17 = sshll.u32 1, 14
  %s18 = sxor.u32 4294967295, %s17
  %22 = dma.general %s1, 128, %s14, %s15, 131072, [#allocation6], 0, 0
  %s23 = smul.u32 2, 1
  %s24 = smul.u32 %s23, 8
  %s25 = sshll.u32 %s24, 4
  %26 = dma.done [#allocation2], %s25
  %s27 = smul.u32 %s23, 4
  %s28 = sshll.u32 %s27, 4
  %29 = dma.done %s15, %s28
  %30 = vsyncmov [#allocation2]
  %s31 = vpop.sfrf %30
  %p32 = scmp.eq.s32.totalorder %s31, 0
  %p33 = pneg %p32
  %35 = shalt.err (%p33)
  %s36 = scalar_lea.sflag [#allocation2], 1
  %37 = vsyncmov %s36
  %s38 = vpop.sfrf %37
  %p39 = scmp.eq.s32.totalorder %s38, 0
  %p40 = pneg %p39
  %42 = shalt.err (%p40)

</llo_original>
